<compile_context>
chip_gen: v7x
topology: tpu7x:2x2x1
jax: 0.10.0
libtpu: 0.0.40
codegen_flags: <defaults>
</compile_context>

<pallas_src>
import functools

import jax
import jax.numpy as jnp
from jax.experimental import pallas as pl
from jax.experimental.pallas import tpu as pltpu

TILE = 128   # node tile for both the output-row axis and the A_hat contraction axis
LANES = 128  # lane width; the class dim is padded up to a multiple of this


def gcn_layer_kernel(a_ref, x_ref, w_ref, b_ref, out_ref, acc_ref, *, apply_relu):
    """One grid step of  out = A_hat @ (X @ W) + b  (optionally ReLU'ed).

    Grid = (row tiles i, contraction tiles k).
      a_ref : (TILE, TILE)  bf16 tile of A_hat
      x_ref : (TILE, F)     bf16 rows of X for contraction tile k
      w_ref : (F, Fout)     bf16 weight (VMEM resident across the grid)
      b_ref : (1, Fout)     f32 bias   (VMEM resident across the grid)
      acc_ref: (TILE, Fout) f32 accumulator scratch
    """
    k = pl.program_id(1)

    @pl.when(k == 0)
    def _():
        acc_ref[...] = jnp.zeros_like(acc_ref)

    # Small feature matmul in bf16 -> f32 accumulation, then cast back to bf16 so
    # the big A_hat matmul also runs at full bf16 MXU rate; accumulate in f32.
    xw = jnp.dot(x_ref[...], w_ref[...], preferred_element_type=jnp.float32)
    acc_ref[...] += jnp.dot(
        a_ref[...], xw.astype(jnp.bfloat16), preferred_element_type=jnp.float32
    )

    @pl.when(k == pl.num_programs(1) - 1)
    def _():
        h = acc_ref[...] + b_ref[...]          # bias add in f32 (VPU)
        if apply_relu:
            h = jnp.maximum(h, 0.0)            # ReLU in f32 (VPU)
        out_ref[...] = h.astype(out_ref.dtype)


def _gcn_layer(a_bf16, x_bf16, w_bf16, b_f32, *, apply_relu, out_dtype):
    """out = A_hat @ (X @ W) + b  as one tiled pallas_call."""
    n_pad = a_bf16.shape[0]
    f_in = x_bf16.shape[1]
    f_out = w_bf16.shape[1]
    kernel = functools.partial(gcn_layer_kernel, apply_relu=apply_relu)
    return pl.pallas_call(
        kernel,
        out_shape=jax.ShapeDtypeStruct((n_pad, f_out), out_dtype),
        grid=(n_pad // TILE, n_pad // TILE),
        in_specs=[
            pl.BlockSpec((TILE, TILE), lambda i, k: (i, k)),   # A_hat tile (streamed)
            pl.BlockSpec((TILE, f_in), lambda i, k: (k, 0)),   # X rows for tile k
            pl.BlockSpec((f_in, f_out), lambda i, k: (0, 0)),  # W (resident)
            pl.BlockSpec((1, f_out), lambda i, k: (0, 0)),     # bias (resident)
        ],
        out_specs=pl.BlockSpec((TILE, f_out), lambda i, k: (i, 0)),
        scratch_shapes=[pltpu.VMEM((TILE, f_out), jnp.float32)],
        compiler_params=pltpu.CompilerParams(
            dimension_semantics=("parallel", "arbitrary"),
            vmem_limit_bytes=32 * 1024 * 1024,
        ),
    )(a_bf16, x_bf16, w_bf16, b_f32)


def graph_conv_net(a_hat, x, w1, b1, w2, b2):
    """Forward pass of GraphConvNet: GCNConv -> ReLU -> GCNConv."""
    n, f_in = x.shape
    num_classes = w2.shape[1]

    # Pad node count to a tile multiple. Padded A rows/cols and X rows are zero,
    # so real output rows stay exact; padded rows are sliced off below.
    n_pad = pl.cdiv(n, TILE) * TILE
    a_p = jnp.zeros((n_pad, n_pad), a_hat.dtype).at[:n, :n].set(a_hat)
    x_p = jnp.zeros((n_pad, f_in), x.dtype).at[:n, :].set(x)

    # Pad the class dim to a full lane slab -> lane-dense stores in layer 2.
    c_pad = pl.cdiv(num_classes, LANES) * LANES
    w2_p = jnp.zeros((w2.shape[0], c_pad), w2.dtype).at[:, :num_classes].set(w2)
    b2_p = jnp.zeros((1, c_pad), b2.dtype).at[:, :num_classes].set(b2)

    # bf16 MXU inputs, f32 accumulation inside the kernels.
    a_bf = a_p.astype(jnp.bfloat16)

    h = _gcn_layer(
        a_bf, x_p.astype(jnp.bfloat16), w1.astype(jnp.bfloat16),
        b1.astype(jnp.float32), apply_relu=True, out_dtype=jnp.bfloat16,
    )
    out_p = _gcn_layer(
        a_bf, h, w2_p.astype(jnp.bfloat16),
        b2_p.astype(jnp.float32), apply_relu=False, out_dtype=jnp.float32,
    )
    return out_p[:n, :num_classes]


def gcn_norm_dense(edge_index, edge_weight, num_nodes):
    """Graph preprocessing (not the hot path): builds the dense symmetrically
    normalized adjacency with self loops, matching torch_geometric gcn_norm."""
    # TODO(synk): for realistic sparse graphs, replace this dense O(N^2) A_hat with a
    # block-sparse formulation (PrefetchScalarGridSpec with scalar-prefetched
    # neighbor-block indices driving the A_hat index_map) instead of materializing zeros.
    src = edge_index[0]
    dst = edge_index[1]
    loop = jnp.arange(num_nodes, dtype=edge_index.dtype)
    src = jnp.concatenate([src, loop])
    dst = jnp.concatenate([dst, loop])
    w = jnp.concatenate(
        [edge_weight, jnp.ones((num_nodes,), dtype=edge_weight.dtype)]
    )
    deg = jnp.zeros((num_nodes,), dtype=edge_weight.dtype).at[dst].add(w)
    deg_inv_sqrt = jnp.where(deg > 0, 1.0 / jnp.sqrt(deg), 0.0)
    norm = deg_inv_sqrt[src] * w * deg_inv_sqrt[dst]
    # out[i] = sum over edges j->i of norm * x[j]  =>  A_hat[dst, src] += norm
    a_hat = (
        jnp.zeros((num_nodes, num_nodes), dtype=edge_weight.dtype)
        .at[dst, src]
        .add(norm)
    )
    return a_hat


def glorot(key, shape):
    fan_in, fan_out = shape
    limit = (6.0 / (fan_in + fan_out)) ** 0.5
    return jax.random.uniform(key, shape, jnp.float32, -limit, limit)


if __name__ == "__main__":
    # Small synthetic graph consistent with the module's forward:
    #   N nodes, num_node_features=16, hidden=128 (fixed by the module), num_classes=8.
    # N is deliberately not a multiple of 128 to exercise the padding path.
    N, F_IN, HIDDEN, NUM_CLASSES, E = 200, 16, 128, 8, 800

    key = jax.random.PRNGKey(0)
    kx, ke, kw, kw1, kb1, kw2, kb2 = jax.random.split(key, 7)

    x = jax.random.normal(kx, (N, F_IN), jnp.float32)                   # data.x
    edge_index = jax.random.randint(ke, (2, E), 0, N, dtype=jnp.int32)  # data.edge_index
    edge_weight = jax.random.uniform(kw, (E,), jnp.float32, 0.1, 1.0)   # data.edge_attr

    # Deterministic parameter init (glorot weights; small random biases to
    # exercise the bias path — init values are not part of the forward spec).
    w1 = glorot(kw1, (F_IN, HIDDEN))
    b1 = 0.1 * jax.random.normal(kb1, (1, HIDDEN), jnp.float32)
    w2 = glorot(kw2, (HIDDEN, NUM_CLASSES))
    b2 = 0.1 * jax.random.normal(kb2, (1, NUM_CLASSES), jnp.float32)

    a_hat = gcn_norm_dense(edge_index, edge_weight, N)

    out = graph_conv_net(a_hat, x, w1, b1, w2, b2)
    jax.block_until_ready(out)

    # Reference of the same math with the same bf16-input / f32-accumulate arithmetic.
    def reference(a, xx, ww1, bb1, ww2, bb2):
        ab = a.astype(jnp.bfloat16)
        xw1 = jnp.dot(xx.astype(jnp.bfloat16), ww1.astype(jnp.bfloat16),
                      preferred_element_type=jnp.float32).astype(jnp.bfloat16)
        h = jnp.maximum(
            jnp.dot(ab, xw1, preferred_element_type=jnp.float32) + bb1, 0.0)
        hw2 = jnp.dot(h.astype(jnp.bfloat16), ww2.astype(jnp.bfloat16),
                      preferred_element_type=jnp.float32).astype(jnp.bfloat16)
        return jnp.dot(ab, hw2, preferred_element_type=jnp.float32) + bb2

    ref = reference(a_hat, x, w1, b1, w2, b2)
    assert out.shape == (N, NUM_CLASSES)
    assert jnp.allclose(out, ref, atol=1e-2, rtol=1e-2), float(
        jnp.max(jnp.abs(out - ref))
    )

    print("KERNEL_OK")
</pallas_src>

<mosaic_0001>
module attributes {stable_mosaic.version = 11 : i64} {
  func.func @gcn_layer_kernel(%arg0: i32, %arg1: i32, %arg2: memref<128x128xbf16, #tpu.memory_space<vmem>>, %arg3: memref<128x16xbf16, #tpu.memory_space<vmem>>, %arg4: memref<16x128xbf16, #tpu.memory_space<vmem>>, %arg5: memref<1x128xf32, #tpu.memory_space<vmem>>, %arg6: memref<128x128xbf16, #tpu.memory_space<vmem>>, %arg7: memref<128x128xf32, #tpu.memory_space<vmem>>) attributes {dimension_semantics = [#tpu.dimension_semantics<parallel>, #tpu.dimension_semantics<arbitrary>], iteration_bounds = array<i64: 2, 2>, scalar_prefetch = 0 : i64, scratch_operands = 1 : i64, tpu.core_type = #tpu.core_type<tc>, window_params = [{transform_indices = @transform_0, window_bounds = array<i64: 128, 128>}, {transform_indices = @transform_1, window_bounds = array<i64: 128, 16>}, {pipeline_mode = #tpu.pipeline_mode<synchronous>, transform_indices = @transform_2, window_bounds = array<i64: 16, 128>}, {pipeline_mode = #tpu.pipeline_mode<synchronous>, transform_indices = @transform_3, window_bounds = array<i64: 1, 128>}, {transform_indices = @transform_4, window_bounds = array<i64: 128, 128>}]} {
    %c0_i32 = arith.constant 0 : i32
    %0 = arith.cmpi eq, %arg1, %c0_i32 : i32
    %1 = arith.extui %0 : i1 to i32
    %c0_i32_0 = arith.constant 0 : i32
    %2 = arith.cmpi ne, %1, %c0_i32_0 : i32
    scf.if %2 {
      %cst_12 = arith.constant 0.000000e+00 : f32
      %15 = vector.broadcast %cst_12 : f32 to vector<128x128xf32>
      %c0_13 = arith.constant 0 : index
      %c0_14 = arith.constant 0 : index
      %16 = vector.load %arg7[%c0_13, %c0_14] : memref<128x128xf32, #tpu.memory_space<vmem>>, vector<128x128xf32>
      tpu.vector_store %arg7[%c0_13, %c0_14], %15 {strides = array<i32>} : memref<128x128xf32, #tpu.memory_space<vmem>>, vector<128x128xf32>,
    } else {
    }
    %c0 = arith.constant 0 : index
    %c0_1 = arith.constant 0 : index
    %3 = vector.load %arg3[%c0, %c0_1] : memref<128x16xbf16, #tpu.memory_space<vmem>>, vector<128x16xbf16>
    %c0_2 = arith.constant 0 : index
    %c0_3 = arith.constant 0 : index
    %4 = vector.load %arg4[%c0_2, %c0_3] : memref<16x128xbf16, #tpu.memory_space<vmem>>, vector<16x128xbf16>
    %cst = arith.constant dense<0.000000e+00> : vector<128x128xf32>
    %5 = tpu.matmul %3, %4, %cst {dimension_numbers = #tpu.dot_dimension_numbers<[1], [0], [0], [1], [0, 0, 1, 1], [], []>} : vector<128x16xbf16>, vector<16x128xbf16>, vector<128x128xf32> -> vector<128x128xf32>
    %c0_4 = arith.constant 0 : index
    %c0_5 = arith.constant 0 : index
    %6 = vector.load %arg7[%c0_4, %c0_5] : memref<128x128xf32, #tpu.memory_space<vmem>>, vector<128x128xf32>
    %c0_6 = arith.constant 0 : index
    %c0_7 = arith.constant 0 : index
    %7 = vector.load %arg2[%c0_6, %c0_7] : memref<128x128xbf16, #tpu.memory_space<vmem>>, vector<128x128xbf16>
    %8 = arith.truncf %5 : vector<128x128xf32> to vector<128x128xbf16>
    %cst_8 = arith.constant dense<0.000000e+00> : vector<128x128xf32>
    %9 = tpu.matmul %7, %8, %cst_8 {dimension_numbers = #tpu.dot_dimension_numbers<[1], [0], [0], [1], [0, 0, 1, 1], [], []>} : vector<128x128xbf16>, vector<128x128xbf16>, vector<128x128xf32> -> vector<128x128xf32>
    %10 = arith.addf %6, %9 : vector<128x128xf32>
    %c0_9 = arith.constant 0 : index
    %c0_10 = arith.constant 0 : index
    %11 = vector.load %arg7[%c0_9, %c0_10] : memref<128x128xf32, #tpu.memory_space<vmem>>, vector<128x128xf32>
    tpu.vector_store %arg7[%c0_9, %c0_10], %10 {strides = array<i32>} : memref<128x128xf32, #tpu.memory_space<vmem>>, vector<128x128xf32>,
    %c1_i32 = arith.constant 1 : i32
    %12 = arith.cmpi eq, %arg1, %c1_i32 : i32
    %13 = arith.extui %12 : i1 to i32
    %c0_i32_11 = arith.constant 0 : i32
    %14 = arith.cmpi ne, %13, %c0_i32_11 : i32
    scf.if %14 {
      %c0_12 = arith.constant 0 : index
      %c0_13 = arith.constant 0 : index
      %15 = vector.load %arg7[%c0_12, %c0_13] : memref<128x128xf32, #tpu.memory_space<vmem>>, vector<128x128xf32>
      %c0_14 = arith.constant 0 : index
      %c0_15 = arith.constant 0 : index
      %16 = vector.load %arg5[%c0_14, %c0_15] : memref<1x128xf32, #tpu.memory_space<vmem>>, vector<1x128xf32>
      %17 = vector.broadcast %16 : vector<1x128xf32> to vector<128x128xf32>
      %18 = arith.addf %15, %17 : vector<128x128xf32>
      %cst_16 = arith.constant 0.000000e+00 : f32
      %19 = vector.broadcast %cst_16 : f32 to vector<128x128xf32>
      %20 = arith.maximumf %18, %19 : vector<128x128xf32>
      %21 = arith.truncf %20 : vector<128x128xf32> to vector<128x128xbf16>
      %c0_17 = arith.constant 0 : index
      %c0_18 = arith.constant 0 : index
      %22 = vector.load %arg6[%c0_17, %c0_18] : memref<128x128xbf16, #tpu.memory_space<vmem>>, vector<128x128xbf16>
      tpu.vector_store %arg6[%c0_17, %c0_18], %21 {strides = array<i32>} : memref<128x128xbf16, #tpu.memory_space<vmem>>, vector<128x128xbf16>,
    } else {
    }
    return
  }
  func.func @transform_0(%arg0: i32, %arg1: i32) -> (i32, i32) {
    %c0_i32 = arith.constant 0 : i32
    return %arg0, %arg1 : i32, i32
  }
  func.func @transform_1(%arg0: i32, %arg1: i32) -> (i32, i32) {
    %c0_i32 = arith.constant 0 : i32
    %c0_i32_0 = arith.constant 0 : i32
    return %arg1, %c0_i32 : i32, i32
  }
  func.func @transform_2(%arg0: i32, %arg1: i32) -> (i32, i32) {
    %c0_i32 = arith.constant 0 : i32
    %c0_i32_0 = arith.constant 0 : i32
    %c0_i32_1 = arith.constant 0 : i32
    return %c0_i32, %c0_i32_0 : i32, i32
  }
  func.func @transform_3(%arg0: i32, %arg1: i32) -> (i32, i32) {
    %c0_i32 = arith.constant 0 : i32
    %c0_i32_0 = arith.constant 0 : i32
    %c0_i32_1 = arith.constant 0 : i32
    return %c0_i32, %c0_i32_0 : i32, i32
  }
  func.func @transform_4(%arg0: i32, %arg1: i32) -> (i32, i32) {
    %c0_i32 = arith.constant 0 : i32
    %c0_i32_0 = arith.constant 0 : i32
    return %arg0, %c0_i32 : i32, i32
  }
}

</mosaic_0001>

<llo_original>
// kernel: tpu_custom_call.1
$region0: #{tpu_custom_call.1}
  #allocation0 [shape = 'u32[]', space=smem, size = 0x4, offset = 0x4, fixed_abs, tag = 'smem constant byte address 0x4 - core index']
  #allocation1 [shape = 'u32[144,128]{1,0:T(1,128)}', space=vmem, size = 0x12000, scoped, tag = 'internal scratch']
  #allocation2 [shape = 'f32[128,128]{1,0:T(8,128)}', space=vmem, size = 0x10000, scoped, tag = 'scratch operand']
  %s0 = inlined_call_operand.hbm [shape: bf16[256,256], index: 0, kind: input, shape index: {}]
  %s1 = inlined_call_operand.vmem [shape: bf16[256,16], index: 1, kind: input, shape index: {}]
  %s2 = inlined_call_operand.vmem [shape: bf16[16,128], index: 2, kind: input, shape index: {}]
  %s3 = inlined_call_operand.vmem [shape: f32[1,128], index: 3, kind: input, shape index: {}]
  %s4 = inlined_call_operand.hbm [shape: bf16[256,128], index: 4, kind: output, shape index: {}]
  %s5 = sld [smem:[#allocation0]]
  $region61: #{tpu_custom_call.1} parent=0
    _
  %s7 = ssub.s32 1, %s5
  %s8 = scalar_select 0, %s7, %s5
  $region1: #{tpu_custom_call.1} parent=0
    #allocation3 [shape = 'u8[65536]{0}', space=vmem, size = 0x10000, scoped, tag = 'input window, operand 0']
    #allocation4 [shape = 's32[2]{0}', space=sflag, size = 0x8, scoped, tag = 'scoped memory for tpu_custom_call.1']
    #allocation5 [shape = 's32[2]{0}', space=sflag, size = 0x8, scoped, tag = 'scoped memory for tpu_custom_call.1']
    #allocation6 [shape = 'u8[65536]{0}', space=vmem, size = 0x10000, scoped, tag = 'output window, operand 0']
    %9 = vsyncpa [#allocation4], 0
    %s10 = scalar_lea.sflag [#allocation4], 1
    %11 = vsyncpa %s10, 0
    %12 = vsyncpa [#allocation5], 0
    %s13 = scalar_lea.sflag [#allocation5], 1
    %14 = vsyncpa %s13, 0
    loop: start=0, step=1, limit=6
    $region2: #{tpu_custom_call.1} parent=1 // loop_pre_header
      _
    $region3: #{tpu_custom_call.1} parent=1 // loop_header
      %s16 = sphi 0, %s20
      %p17 = scmp.ge.s32.totalorder %s16, 6
      %s23 = sphi 0, %s35
      %s24 = sphi 0, %s31
      %s25 = sphi 0, %s23
      %s26 = sphi 0, %s24
      %s27 = sphi 0, %s25
      %s28 = sphi 0, %s26
      %s40 = sphi 0, %s42
      %s43 = sphi 0, %s40
      %s44 = sphi 0, %s43
      %s60 = sphi 0, %s44
      %s66 = sphi 0, %s68
      %s69 = sphi 0, %s66
      %s70 = sphi 0, %s69
      %s86 = sphi 0, %s70
      %s90 = sphi 0, %s90
      %s92 = sphi 0, %s90
      %s93 = sphi 0, %s92
      %s107 = sphi 0, %s93
      %s111 = sphi 0, %s111
      %s113 = sphi 0, %s111
      %s114 = sphi 0, %s113
      %s128 = sphi 0, %s114
      %s134 = sphi 0, %s136
      %s137 = sphi 0, %s134
      %s138 = sphi 0, %s137
      %s154 = sphi 0, %s138
    $region4: #{tpu_custom_call.1} parent=1 // loop_header_branch
      %19 = sbr.rel (%p17) target = $region8
    $region5: #{tpu_custom_call.1} parent=1 // loop_body
      %s21 = ssub.s32 %s16, 1
      %s22 = ssub.s32 %s16, 2
      %s29 = sadd.s32 1, %s24
      %p30 = scmp.ge.s32.totalorder %s29, 2
      %s31 = scalar_select %p30, 0, %s29
      %s32 = sadd.s32 1, %s23
      %s33 = scalar_select %p30, %s32, %s23
      %p34 = scmp.ge.s32.totalorder %s33, 2
      %s35 = scalar_select %p34, 0, %s33
      %s36 = ssub.s32 %s23, %s35
      %s37 = ssub.s32 %s24, %s31
      %s38 = sor.u32 %s36, %s37
      %p39 = scmp.eq.s32.totalorder %s38, 0
      %s41 = sadd.s32 %s40, 1
      %s42 = scalar_select %p39, %s40, %s41
      %p45 = pneg %p39
      %p46 = scmp.eq.s32.totalorder %s16, 3
      %p47 = por %p45, %p46
      %p48 = scmp.ne.s32.totalorder %s40, %s43
      %p49 = scmp.eq.s32.totalorder %s16, 0
      %p50 = por %p48, %p49
      %p51 = scmp.ne.s32.totalorder %s40, %s43
      %p52 = scmp.eq.s32.totalorder %s21, 3
      %p53 = por %p51, %p52
      %p54 = scmp.ne.s32.totalorder %s43, %s44
      %p55 = scmp.eq.s32.totalorder %s21, 0
      %p56 = por %p54, %p55
      %p57 = scmp.ne.s32.totalorder %s43, %s44
      %p58 = scmp.eq.s32.totalorder %s22, 3
      %p59 = por %p57, %p58
      %p61 = scmp.ne.s32.totalorder %s44, %s60
      %p62 = scmp.eq.s32.totalorder %s22, 0
      %p63 = por %p61, %p62
      %s64 = ssub.s32 %s24, %s31
      %p65 = scmp.eq.s32.totalorder %s64, 0
      %s67 = sadd.s32 %s66, 1
      %s68 = scalar_select %p65, %s66, %s67
      %p71 = pneg %p65
      %p72 = scmp.eq.s32.totalorder %s16, 3
      %p73 = por %p71, %p72
      %p74 = scmp.ne.s32.totalorder %s66, %s69
      %p75 = scmp.eq.s32.totalorder %s16, 0
      %p76 = por %p74, %p75
      %p77 = scmp.ne.s32.totalorder %s66, %s69
      %p78 = scmp.eq.s32.totalorder %s21, 3
      %p79 = por %p77, %p78
      %p80 = scmp.ne.s32.totalorder %s69, %s70
      %p81 = scmp.eq.s32.totalorder %s21, 0
      %p82 = por %p80, %p81
      %p83 = scmp.ne.s32.totalorder %s69, %s70
      %p84 = scmp.eq.s32.totalorder %s22, 3
      %p85 = por %p83, %p84
      %p87 = scmp.ne.s32.totalorder %s70, %s86
      %p88 = scmp.eq.s32.totalorder %s22, 0
      %p89 = por %p87, %p88
      %s91 = sadd.s32 %s90, 1
      %p94 = scmp.eq.s32.totalorder %s16, 3
      %p95 = scmp.ne.s32.totalorder %s90, %s92
      %p96 = scmp.eq.s32.totalorder %s16, 0
      %p97 = por %p95, %p96
      %p98 = scmp.ne.s32.totalorder %s90, %s92
      %p99 = scmp.eq.s32.totalorder %s21, 3
      %p100 = por %p98, %p99
      %p101 = scmp.ne.s32.totalorder %s92, %s93
      %p102 = scmp.eq.s32.totalorder %s21, 0
      %p103 = por %p101, %p102
      %p104 = scmp.ne.s32.totalorder %s92, %s93
      %p105 = scmp.eq.s32.totalorder %s22, 3
      %p106 = por %p104, %p105
      %p108 = scmp.ne.s32.totalorder %s93, %s107
      %p109 = scmp.eq.s32.totalorder %s22, 0
      %p110 = por %p108, %p109
      %s112 = sadd.s32 %s111, 1
      %p115 = scmp.eq.s32.totalorder %s16, 3
      %p116 = scmp.ne.s32.totalorder %s111, %s113
      %p117 = scmp.eq.s32.totalorder %s16, 0
      %p118 = por %p116, %p117
      %p119 = scmp.ne.s32.totalorder %s111, %s113
      %p120 = scmp.eq.s32.totalorder %s21, 3
      %p121 = por %p119, %p120
      %p122 = scmp.ne.s32.totalorder %s113, %s114
      %p123 = scmp.eq.s32.totalorder %s21, 0
      %p124 = por %p122, %p123
      %p125 = scmp.ne.s32.totalorder %s113, %s114
      %p126 = scmp.eq.s32.totalorder %s22, 3
      %p127 = por %p125, %p126
      %p129 = scmp.ne.s32.totalorder %s114, %s128
      %p130 = scmp.eq.s32.totalorder %s22, 0
      %p131 = por %p129, %p130
      %s132 = ssub.s32 %s23, %s35
      %p133 = scmp.eq.s32.totalorder %s132, 0
      %s135 = sadd.s32 %s134, 1
      %s136 = scalar_select %p133, %s134, %s135
      %p139 = pneg %p133
      %p140 = scmp.eq.s32.totalorder %s16, 3
      %p141 = por %p139, %p140
      %p142 = scmp.ne.s32.totalorder %s134, %s137
      %p143 = scmp.eq.s32.totalorder %s16, 0
      %p144 = por %p142, %p143
      %p145 = scmp.ne.s32.totalorder %s134, %s137
      %p146 = scmp.eq.s32.totalorder %s21, 3
      %p147 = por %p145, %p146
      %p148 = scmp.ne.s32.totalorder %s137, %s138
      %p149 = scmp.eq.s32.totalorder %s21, 0
      %p150 = por %p148, %p149
      %p151 = scmp.ne.s32.totalorder %s137, %s138
      %p152 = scmp.eq.s32.totalorder %s22, 3
      %p153 = por %p151, %p152
      %p155 = scmp.ne.s32.totalorder %s138, %s154
      %p156 = scmp.eq.s32.totalorder %s22, 0
      %p157 = por %p155, %p156
      %p158 = scmp.le.s32.totalorder 1, %s16
      %p159 = scmp.lt.s32.totalorder %s16, 5
      %p160 = pnand %p158, %p159
      %p161 = pneg %p160
      // Predicated region
      $region9: #{tpu_custom_call.1} parent=5 // pred_check
        _
      $region10: #{tpu_custom_call.1} parent=5 // pred_check_branch
        %163 = sbr.rel (%p160) target = $region12
      $region11: #{tpu_custom_call.1} parent=5 // pred_region
        %s164 = ssub.s32 %s16, 1
        // Predicated region
        $region13: #{tpu_custom_call.1} parent=11 // pred_check
          %p165 = pneg %p103
        $region14: #{tpu_custom_call.1} parent=11 // pred_check_branch
          %167 = sbr.rel (%p165) target = $region16
        $region15: #{tpu_custom_call.1} parent=11 // pred_region
          _
        $region16: #{tpu_custom_call.1} parent=11 // pred_fallthru
          _
        // Predicated region
        $region17: #{tpu_custom_call.1} parent=11 // pred_check
          %p168 = pneg %p124
        $region18: #{tpu_custom_call.1} parent=11 // pred_check_branch
          %170 = sbr.rel (%p168) target = $region20
        $region19: #{tpu_custom_call.1} parent=11 // pred_region
          _
        $region20: #{tpu_custom_call.1} parent=11 // pred_fallthru
          _
      $region12: #{tpu_custom_call.1} parent=5 // pred_fallthru
        _
      %p171 = scmp.lt.s32.totalorder %s16, 4
      // Predicated region
      $region21: #{tpu_custom_call.1} parent=5 // pred_check
        %p172 = pneg %p171
      $region22: #{tpu_custom_call.1} parent=5 // pred_check_branch
        %174 = sbr.rel (%p172) target = $region24
      $region23: #{tpu_custom_call.1} parent=5 // pred_region
        // Predicated region
        $region25: #{tpu_custom_call.1} parent=23 // pred_check
          %p175 = pneg %p50
        $region26: #{tpu_custom_call.1} parent=23 // pred_check_branch
          %177 = sbr.rel (%p175) target = $region28
        $region27: #{tpu_custom_call.1} parent=23 // pred_region
          %s178 = sand.u32 %s40, 1
          %s179 = scalar_lea.sflag [#allocation4], %s178
          %s180 = sand.u32 %s40, 1
          %s181 = smul.addr %s180, 64
          %s182 = scalar_lea.vmem [#allocation3], %s181
          %s183 = smul.u32 16, %s23
          %s185 = ssub.s32 1024, 1024
          %186 = vsyncadd %s179, %s185
          %s187 = smul.addr %s183, 2
          %s188 = sadd.s32 %s24, %s187
          %s189 = smul.addr %s188, 64
          %s190 = scalar_lea.hbm %s0, %s189
          %s191 = sshll.u32 %s182, 4
          %s192 = int_to_ptr.vmem [resolvable:$true] %s191
          %197 = dma.hbm_to_vmem [thread:$0]  %s190, 1024, %s192, %s179, 128, 64, 4
        $region28: #{tpu_custom_call.1} parent=23 // pred_fallthru
          _
        // Predicated region
        $region29: #{tpu_custom_call.1} parent=23 // pred_check
          %p198 = pneg %p76
        $region30: #{tpu_custom_call.1} parent=23 // pred_check_branch
          %200 = sbr.rel (%p198) target = $region32
        $region31: #{tpu_custom_call.1} parent=23 // pred_region
          %s201 = smul.u32 16, %s24
          %p202 = scmp.lt.s32.totalorder %s201, 31
          %s203 = scalar_select %p202, %s201, 31
          %s204 = smul.addr %s203, 4
          %s205 = scalar_lea.vmem %s1, %s204
          %s206 = smul.u32 16, %s24
        $region32: #{tpu_custom_call.1} parent=23 // pred_fallthru
          _
      $region24: #{tpu_custom_call.1} parent=5 // pred_fallthru
        _
      %p207 = scmp.le.s32.totalorder 1, %s16
      %p208 = scmp.lt.s32.totalorder %s16, 5
      %p209 = pnand %p207, %p208
      %p210 = pneg %p209
      // Predicated region
      $region33: #{tpu_custom_call.1} parent=5 // pred_check
        _
      $region34: #{tpu_custom_call.1} parent=5 // pred_check_branch
        %212 = sbr.rel (%p209) target = $region36
      $region35: #{tpu_custom_call.1} parent=5 // pred_region
        %s213 = ssub.s32 %s16, 1
        %s214 = sand.u32 %s43, 1
        %s215 = scalar_lea.sflag [#allocation4], %s214
        %s216 = sand.u32 %s43, 1
        %s217 = smul.addr %s216, 64
        %s218 = scalar_lea.vmem [#allocation3], %s217
        // Predicated region
        $region37: #{tpu_custom_call.1} parent=35 // pred_check
          %p219 = pneg %p56
        $region38: #{tpu_custom_call.1} parent=35 // pred_check_branch
          %221 = sbr.rel (%p219) target = $region40
        $region39: #{tpu_custom_call.1} parent=35 // pred_region
          %222 = dma.done %s215, 1024
        $region40: #{tpu_custom_call.1} parent=35 // pred_fallthru
          _
        %s223 = sand.u32 %s43, 1
        %s224 = scalar_lea.sflag [#allocation4], %s223
        %s225 = sand.u32 %s43, 1
        %s226 = smul.addr %s225, 64
        %s227 = scalar_lea.vmem [#allocation3], %s226
        %p228 = pneg %p56
        %p229 = pneg %p53
        %s230 = smul.u32 16, %s26
        %p231 = scmp.lt.s32.totalorder %s230, 31
        %s232 = scalar_select %p231, %s230, 31
        %s233 = smul.addr %s232, 4
        %s234 = scalar_lea.vmem %s1, %s233
        %p235 = pneg %p82
        %p236 = pneg %p79
        %p237 = pneg %p103
        %p238 = pneg %p100
        %p239 = pneg %p124
        %p240 = pneg %p121
        %p241 = pneg %p150
        %p242 = pneg %p147
        %s243 = sand.u32 %s137, 1
        %s244 = scalar_lea.sflag [#allocation5], %s243
        %s245 = sand.u32 %s137, 1
        %s246 = smul.addr %s245, 64
        %s247 = scalar_lea.vmem [#allocation6], %s246
        %s248 = smul.u32 16, %s25
        %s249 = smul.u32 16, %s26
        %p250 = scmp.lt.s32.totalorder %s249, 31
        %s251 = scalar_select %p250, %s249, 31
        %s252 = smul.addr %s251, 4
        %s253 = scalar_lea.vmem %s1, %s252
        %s254 = smul.u32 16, %s26
        %s255 = smul.u32 16, %s25
        %p257 = scmp.eq.s32.totalorder %s26, 0
        // Predicated region
        $region41: #{tpu_custom_call.1} parent=35 // pred_check
          %p258 = pneg %p257
        $region42: #{tpu_custom_call.1} parent=35 // pred_check_branch
          %260 = sbr.rel (%p258) target = $region44
        $region43: #{tpu_custom_call.1} parent=35 // pred_region
          %261 = vst [vmem:[#allocation2] sm:$0xff] 0.0
          %262 = vst [vmem:[#allocation2 + $0x8] sm:$0xff] 0.0
          %263 = vst [vmem:[#allocation2 + $0x10] sm:$0xff] 0.0
          %264 = vst [vmem:[#allocation2 + $0x18] sm:$0xff] 0.0
          %265 = vst [vmem:[#allocation2 + $0x20] sm:$0xff] 0.0
          %266 = vst [vmem:[#allocation2 + $0x28] sm:$0xff] 0.0
          %267 = vst [vmem:[#allocation2 + $0x30] sm:$0xff] 0.0
          %268 = vst [vmem:[#allocation2 + $0x38] sm:$0xff] 0.0
          %269 = vst [vmem:[#allocation2 + $0x40] sm:$0xff] 0.0
          %270 = vst [vmem:[#allocation2 + $0x48] sm:$0xff] 0.0
          %271 = vst [vmem:[#allocation2 + $0x50] sm:$0xff] 0.0
          %272 = vst [vmem:[#allocation2 + $0x58] sm:$0xff] 0.0
          %273 = vst [vmem:[#allocation2 + $0x60] sm:$0xff] 0.0
          %274 = vst [vmem:[#allocation2 + $0x68] sm:$0xff] 0.0
          %275 = vst [vmem:[#allocation2 + $0x70] sm:$0xff] 0.0
          %276 = vst [vmem:[#allocation2 + $0x78] sm:$0xff] 0.0
        $region44: #{tpu_custom_call.1} parent=35 // pred_fallthru
          _
        %v277 = vld [vmem:[%s253] sm:$0xf]
        %v278 = vld [vmem:[%s253 + $0x4] sm:$0xf]
        %v279 = vld [vmem:[%s253 + $0x8] sm:$0xf]
        %v280 = vld [vmem:[%s253 + $0xc] sm:$0xf]
        %v281 = vld [vmem:[%s253 + $0x10] sm:$0xf]
        %v282 = vld [vmem:[%s253 + $0x14] sm:$0xf]
        %v283 = vld [vmem:[%s253 + $0x18] sm:$0xf]
        %v284 = vld [vmem:[%s253 + $0x1c] sm:$0xf]
        %v285 = vld [vmem:[%s253 + $0x20] sm:$0xf]
        %v286 = vld [vmem:[%s253 + $0x24] sm:$0xf]
        %v287 = vld [vmem:[%s253 + $0x28] sm:$0xf]
        %v288 = vld [vmem:[%s253 + $0x2c] sm:$0xf]
        %v289 = vld [vmem:[%s253 + $0x30] sm:$0xf]
        %v290 = vld [vmem:[%s253 + $0x34] sm:$0xf]
        %v291 = vld [vmem:[%s253 + $0x38] sm:$0xf]
        %v292 = vld [vmem:[%s253 + $0x3c] sm:$0xf]
        %v293 = vld [vmem:[%s2] sm:$0xf]
        %v294 = vld [vmem:[%s2 + $0x4] sm:$0xf]
        %v311 = vunpack.c.l.b16 %v277
        %v312 = vunpack.c.l.b16 %v278
        %v313 = vunpack.c.l.b16 %v279
        %v314 = vunpack.c.l.b16 %v280
        %v315 = vunpack.c.l.b16 %v281
        %v316 = vunpack.c.l.b16 %v282
        %v317 = vunpack.c.l.b16 %v283
        %v318 = vunpack.c.l.b16 %v284
        %v319 = vunpack.c.l.b16 %v285
        %v320 = vunpack.c.l.b16 %v286
        %v321 = vunpack.c.l.b16 %v287
        %v322 = vunpack.c.l.b16 %v288
        %v323 = vunpack.c.l.b16 %v289
        %v324 = vunpack.c.l.b16 %v290
        %v325 = vunpack.c.l.b16 %v291
        %v326 = vunpack.c.l.b16 %v292
        %v327 = vpack.c.b16 %v312, %v311
        %v328 = vpack.c.b16 %v314, %v313
        %v329 = vpack.c.b16 %v316, %v315
        %v330 = vpack.c.b16 %v318, %v317
        %v331 = vpack.c.b16 %v320, %v319
        %v332 = vpack.c.b16 %v322, %v321
        %v333 = vpack.c.b16 %v324, %v323
        %v334 = vpack.c.b16 %v326, %v325
        %v337 = vunpack.c.l.b16 %v293
        %v338 = vunpack.c.l.b16 %v294
        %v339 = vpack.c.b16 %v338, %v337
        %vm341 = vcmask 130048
        %v343 = vsel %vm341, %v327, 0
        %v346 = vsel %vm341, %v328, 0
        %v349 = vsel %vm341, %v329, 0
        %v352 = vsel %vm341, %v330, 0
        %v355 = vsel %vm341, %v331, 0
        %v358 = vsel %vm341, %v332, 0
        %v361 = vsel %vm341, %v333, 0
        %v364 = vsel %vm341, %v334, 0
        %366 = vmatprep.subr.bf16.mxu0 0
        %367 = vmatpush1.bf16.msra.mxu0 %v339
        %368 = vmatprep.subr.bf16.mxu0 0
        %369 = vmatpush1.bf16.msra.mxu0 0
        %370 = vmatprep.subr.bf16.mxu0 0
        %371 = vmatpush1.bf16.msra.mxu0 0
        %372 = vmatprep.subr.bf16.mxu0 0
        %373 = vmatpush1.bf16.msra.mxu0 0
        %374 = vmatprep.subr.bf16.mxu0 0
        %375 = vmatpush1.bf16.msra.mxu0 0
        %376 = vmatprep.subr.bf16.mxu0 0
        %377 = vmatpush1.bf16.msra.mxu0 0
        %378 = vmatprep.subr.bf16.mxu0 0
        %379 = vmatpush1.bf16.msra.mxu0 0
        %380 = vmatprep.subr.bf16.mxu0 0
        %381 = vmatpush1.bf16.msra.mxu0 0
        %382 = vmatprep.subr.bf16.mxu0 0
        %383 = vmatpush1.bf16.msra.mxu0 0
        %384 = vmatprep.subr.bf16.mxu0 0
        %385 = vmatpush1.bf16.msra.mxu0 0
        %386 = vmatprep.subr.bf16.mxu0 0
        %387 = vmatpush1.bf16.msra.mxu0 0
        %388 = vmatprep.subr.bf16.mxu0 0
        %389 = vmatpush1.bf16.msra.mxu0 0
        %390 = vmatprep.subr.bf16.mxu0 0
        %391 = vmatpush1.bf16.msra.mxu0 0
        %392 = vmatprep.subr.bf16.mxu0 0
        %393 = vmatpush1.bf16.msra.mxu0 0
        %394 = vmatprep.subr.bf16.mxu0 0
        %395 = vmatpush1.bf16.msra.mxu0 0
        %396 = vmatprep.subr.bf16.mxu0 0
        %397 = vmatpush1.bf16.msra.mxu0 0
        %398 = vmatprep.mubr.bf16.mxu0 0
        %399 = vmatmul.mubr.bf16.gmra.mrb[0].mxu0 %v343
        %v400 = vpop.f32.mrb[0].mxu0
        %v401 = vadd.f32 0.0, %v400
        %v402 = vpop.f32.mrb[0].mxu0
        %v403 = vpop.f32.mrb[0].mxu0
        %v404 = vadd.f32 0.0, %v403
        %v405 = vpop.f32.mrb[0].mxu0
        %406 = vmatprep.mubr.bf16.mxu0 0
        %407 = vmatmul.mubr.bf16.gmra.mrb[0].mxu0 %v346
        %v408 = vpop.f32.mrb[0].mxu0
        %v409 = vadd.f32 0.0, %v408
        %v410 = vpop.f32.mrb[0].mxu0
        %v411 = vpop.f32.mrb[0].mxu0
        %v412 = vadd.f32 0.0, %v411
        %v413 = vpop.f32.mrb[0].mxu0
        %414 = vmatprep.mubr.bf16.mxu0 0
        %415 = vmatmul.mubr.bf16.gmra.mrb[0].mxu0 %v349
        %v416 = vpop.f32.mrb[0].mxu0
        %v417 = vadd.f32 0.0, %v416
        %v418 = vpop.f32.mrb[0].mxu0
        %v419 = vpop.f32.mrb[0].mxu0
        %v420 = vadd.f32 0.0, %v419
        %v421 = vpop.f32.mrb[0].mxu0
        %422 = vmatprep.mubr.bf16.mxu0 0
        %423 = vmatmul.mubr.bf16.gmra.mrb[0].mxu0 %v352
        %v424 = vpop.f32.mrb[0].mxu0
        %v425 = vadd.f32 0.0, %v424
        %v426 = vpop.f32.mrb[0].mxu0
        %v427 = vpop.f32.mrb[0].mxu0
        %v428 = vadd.f32 0.0, %v427
        %v429 = vpop.f32.mrb[0].mxu0
        %430 = vmatprep.mubr.bf16.mxu0 0
        %431 = vmatmul.mubr.bf16.gmra.mrb[0].mxu0 %v355
        %v432 = vpop.f32.mrb[0].mxu0
        %v433 = vadd.f32 0.0, %v432
        %v434 = vpop.f32.mrb[0].mxu0
        %v435 = vpop.f32.mrb[0].mxu0
        %v436 = vadd.f32 0.0, %v435
        %v437 = vpop.f32.mrb[0].mxu0
        %438 = vmatprep.mubr.bf16.mxu0 0
        %439 = vmatmul.mubr.bf16.gmra.mrb[0].mxu0 %v358
        %v440 = vpop.f32.mrb[0].mxu0
        %v441 = vadd.f32 0.0, %v440
        %v442 = vpop.f32.mrb[0].mxu0
        %v443 = vpop.f32.mrb[0].mxu0
        %v444 = vadd.f32 0.0, %v443
        %v445 = vpop.f32.mrb[0].mxu0
        %446 = vmatprep.mubr.bf16.mxu0 0
        %447 = vmatmul.mubr.bf16.gmra.mrb[0].mxu0 %v361
        %v448 = vpop.f32.mrb[0].mxu0
        %v449 = vadd.f32 0.0, %v448
        %v450 = vpop.f32.mrb[0].mxu0
        %v451 = vpop.f32.mrb[0].mxu0
        %v452 = vadd.f32 0.0, %v451
        %v453 = vpop.f32.mrb[0].mxu0
        %454 = vmatprep.mubr.bf16.mxu0 0
        %455 = vmatmul.mubr.bf16.gmra.mrb[0].mxu0 %v364
        %v456 = vpop.f32.mrb[0].mxu0
        %v457 = vadd.f32 0.0, %v456
        %v458 = vpop.f32.mrb[0].mxu0
        %v459 = vpop.f32.mrb[0].mxu0
        %v460 = vadd.f32 0.0, %v459
        %v461 = vpop.f32.mrb[0].mxu0
        %462 = vdwg.mxu0
        %v463 = vld [vmem:[#allocation2] sm:$0xff]
        %v464 = vld [vmem:[#allocation2 + $0x8] sm:$0xff]
        %v465 = vld [vmem:[#allocation2 + $0x10] sm:$0xff]
        %v466 = vld [vmem:[#allocation2 + $0x18] sm:$0xff]
        %v467 = vld [vmem:[#allocation2 + $0x20] sm:$0xff]
        %v468 = vld [vmem:[#allocation2 + $0x28] sm:$0xff]
        %v469 = vld [vmem:[#allocation2 + $0x30] sm:$0xff]
        %v470 = vld [vmem:[#allocation2 + $0x38] sm:$0xff]
        %v471 = vld [vmem:[#allocation2 + $0x40] sm:$0xff]
        %v472 = vld [vmem:[#allocation2 + $0x48] sm:$0xff]
        %v473 = vld [vmem:[#allocation2 + $0x50] sm:$0xff]
        %v474 = vld [vmem:[#allocation2 + $0x58] sm:$0xff]
        %v475 = vld [vmem:[#allocation2 + $0x60] sm:$0xff]
        %v476 = vld [vmem:[#allocation2 + $0x68] sm:$0xff]
        %v477 = vld [vmem:[#allocation2 + $0x70] sm:$0xff]
        %v478 = vld [vmem:[#allocation2 + $0x78] sm:$0xff]
        %v479 = vld [vmem:[%s218] sm:$0xf]
        %v480 = vld [vmem:[%s218 + $0x4] sm:$0xf]
        %v481 = vld [vmem:[%s218 + $0x8] sm:$0xf]
        %v482 = vld [vmem:[%s218 + $0xc] sm:$0xf]
        %v483 = vld [vmem:[%s218 + $0x10] sm:$0xf]
        %v484 = vld [vmem:[%s218 + $0x14] sm:$0xf]
        %v485 = vld [vmem:[%s218 + $0x18] sm:$0xf]
        %v486 = vld [vmem:[%s218 + $0x1c] sm:$0xf]
        %v487 = vld [vmem:[%s218 + $0x20] sm:$0xf]
        %v488 = vld [vmem:[%s218 + $0x24] sm:$0xf]
        %v489 = vld [vmem:[%s218 + $0x28] sm:$0xf]
        %v490 = vld [vmem:[%s218 + $0x2c] sm:$0xf]
        %v491 = vld [vmem:[%s218 + $0x30] sm:$0xf]
        %v492 = vld [vmem:[%s218 + $0x34] sm:$0xf]
        %v493 = vld [vmem:[%s218 + $0x38] sm:$0xf]
        %v494 = vld [vmem:[%s218 + $0x3c] sm:$0xf]
        %v495 = vpack.c.bf16 %v404, %v401
        %v496 = vpack.c.bf16 %v412, %v409
        %v497 = vpack.c.bf16 %v420, %v417
        %v498 = vpack.c.bf16 %v428, %v425
        %v499 = vpack.c.bf16 %v436, %v433
        %v500 = vpack.c.bf16 %v444, %v441
        %v501 = vpack.c.bf16 %v452, %v449
        %v502 = vpack.c.bf16 %v460, %v457
        %v519 = vunpack.c.l.b16 %v479
        %v520 = vunpack.c.l.b16 %v480
        %v521 = vunpack.c.l.b16 %v481
        %v522 = vunpack.c.l.b16 %v482
        %v523 = vunpack.c.l.b16 %v483
        %v524 = vunpack.c.l.b16 %v484
        %v525 = vunpack.c.l.b16 %v485
        %v526 = vunpack.c.l.b16 %v486
        %v527 = vunpack.c.l.b16 %v487
        %v528 = vunpack.c.l.b16 %v488
        %v529 = vunpack.c.l.b16 %v489
        %v530 = vunpack.c.l.b16 %v490
        %v531 = vunpack.c.l.b16 %v491
        %v532 = vunpack.c.l.b16 %v492
        %v533 = vunpack.c.l.b16 %v493
        %v534 = vunpack.c.l.b16 %v494
        %v535 = vpack.c.b16 %v520, %v519
        %v536 = vpack.c.b16 %v522, %v521
        %v537 = vpack.c.b16 %v524, %v523
        %v538 = vpack.c.b16 %v526, %v525
        %v539 = vpack.c.b16 %v528, %v527
        %v540 = vpack.c.b16 %v530, %v529
        %v541 = vpack.c.b16 %v532, %v531
        %v542 = vpack.c.b16 %v534, %v533
        %551 = vmatprep.subr.bf16.mxu0 0
        %552 = vmatpush1.bf16.msra.mxu0 %v495
        %553 = vmatprep.subr.bf16.mxu0 0
        %554 = vmatpush1.bf16.msra.mxu0 %v496
        %555 = vmatprep.subr.bf16.mxu0 0
        %556 = vmatpush1.bf16.msra.mxu0 %v497
        %557 = vmatprep.subr.bf16.mxu0 0
        %558 = vmatpush1.bf16.msra.mxu0 %v498
        %559 = vmatprep.subr.bf16.mxu0 0
        %560 = vmatpush1.bf16.msra.mxu0 %v499
        %561 = vmatprep.subr.bf16.mxu0 0
        %562 = vmatpush1.bf16.msra.mxu0 %v500
        %563 = vmatprep.subr.bf16.mxu0 0
        %564 = vmatpush1.bf16.msra.mxu0 %v501
        %565 = vmatprep.subr.bf16.mxu0 0
        %566 = vmatpush1.bf16.msra.mxu0 %v502
        %567 = vmatprep.subr.bf16.mxu0 0
        %568 = vmatpush1.bf16.msra.mxu0 0
        %569 = vmatprep.subr.bf16.mxu0 0
        %570 = vmatpush1.bf16.msra.mxu0 0
        %571 = vmatprep.subr.bf16.mxu0 0
        %572 = vmatpush1.bf16.msra.mxu0 0
        %573 = vmatprep.subr.bf16.mxu0 0
        %574 = vmatpush1.bf16.msra.mxu0 0
        %575 = vmatprep.subr.bf16.mxu0 0
        %576 = vmatpush1.bf16.msra.mxu0 0
        %577 = vmatprep.subr.bf16.mxu0 0
        %578 = vmatpush1.bf16.msra.mxu0 0
        %579 = vmatprep.subr.bf16.mxu0 0
        %580 = vmatpush1.bf16.msra.mxu0 0
        %581 = vmatprep.subr.bf16.mxu0 0
        %582 = vmatpush1.bf16.msra.mxu0 0
        %583 = vmatprep.mubr.bf16.mxu0 0
        %584 = vmatmul.mubr.bf16.gmra.mrb[0].mxu0 %v535
        %v585 = vpop.f32.mrb[0].mxu0
        %v586 = vadd.f32 0.0, %v585
        %v587 = vpop.f32.mrb[0].mxu0
        %v588 = vpop.f32.mrb[0].mxu0
        %v589 = vadd.f32 0.0, %v588
        %v590 = vpop.f32.mrb[0].mxu0
        %591 = vmatprep.mubr.bf16.mxu0 0
        %592 = vmatmul.mubr.bf16.gmra.mrb[0].mxu0 %v536
        %v593 = vpop.f32.mrb[0].mxu0
        %v594 = vadd.f32 0.0, %v593
        %v595 = vpop.f32.mrb[0].mxu0
        %v596 = vpop.f32.mrb[0].mxu0
        %v597 = vadd.f32 0.0, %v596
        %v598 = vpop.f32.mrb[0].mxu0
        %599 = vmatprep.mubr.bf16.mxu0 0
        %600 = vmatmul.mubr.bf16.gmra.mrb[0].mxu0 %v537
        %v601 = vpop.f32.mrb[0].mxu0
        %v602 = vadd.f32 0.0, %v601
        %v603 = vpop.f32.mrb[0].mxu0
        %v604 = vpop.f32.mrb[0].mxu0
        %v605 = vadd.f32 0.0, %v604
        %v606 = vpop.f32.mrb[0].mxu0
        %607 = vmatprep.mubr.bf16.mxu0 0
        %608 = vmatmul.mubr.bf16.gmra.mrb[0].mxu0 %v538
        %v609 = vpop.f32.mrb[0].mxu0
        %v610 = vadd.f32 0.0, %v609
        %v611 = vpop.f32.mrb[0].mxu0
        %v612 = vpop.f32.mrb[0].mxu0
        %v613 = vadd.f32 0.0, %v612
        %v614 = vpop.f32.mrb[0].mxu0
        %615 = vmatprep.mubr.bf16.mxu0 0
        %616 = vmatmul.mubr.bf16.gmra.mrb[0].mxu0 %v539
        %v617 = vpop.f32.mrb[0].mxu0
        %v618 = vadd.f32 0.0, %v617
        %v619 = vpop.f32.mrb[0].mxu0
        %v620 = vpop.f32.mrb[0].mxu0
        %v621 = vadd.f32 0.0, %v620
        %v622 = vpop.f32.mrb[0].mxu0
        %623 = vmatprep.mubr.bf16.mxu0 0
        %624 = vmatmul.mubr.bf16.gmra.mrb[0].mxu0 %v540
        %v625 = vpop.f32.mrb[0].mxu0
        %v626 = vadd.f32 0.0, %v625
        %v627 = vpop.f32.mrb[0].mxu0
        %v628 = vpop.f32.mrb[0].mxu0
        %v629 = vadd.f32 0.0, %v628
        %v630 = vpop.f32.mrb[0].mxu0
        %631 = vmatprep.mubr.bf16.mxu0 0
        %632 = vmatmul.mubr.bf16.gmra.mrb[0].mxu0 %v541
        %v633 = vpop.f32.mrb[0].mxu0
        %v634 = vadd.f32 0.0, %v633
        %v635 = vpop.f32.mrb[0].mxu0
        %v636 = vpop.f32.mrb[0].mxu0
        %v637 = vadd.f32 0.0, %v636
        %v638 = vpop.f32.mrb[0].mxu0
        %639 = vmatprep.mubr.bf16.mxu0 0
        %640 = vmatmul.mubr.bf16.gmra.mrb[0].mxu0 %v542
        %v641 = vpop.f32.mrb[0].mxu0
        %v642 = vadd.f32 0.0, %v641
        %v643 = vpop.f32.mrb[0].mxu0
        %v644 = vpop.f32.mrb[0].mxu0
        %v645 = vadd.f32 0.0, %v644
        %v646 = vpop.f32.mrb[0].mxu0
        %647 = vdwg.mxu0
        %v648 = vadd.f32 %v463, %v586
        %v649 = vadd.f32 %v464, %v589
        %v650 = vadd.f32 %v465, %v594
        %v651 = vadd.f32 %v466, %v597
        %v652 = vadd.f32 %v467, %v602
        %v653 = vadd.f32 %v468, %v605
        %v654 = vadd.f32 %v469, %v610
        %v655 = vadd.f32 %v470, %v613
        %v656 = vadd.f32 %v471, %v618
        %v657 = vadd.f32 %v472, %v621
        %v658 = vadd.f32 %v473, %v626
        %v659 = vadd.f32 %v474, %v629
        %v660 = vadd.f32 %v475, %v634
        %v661 = vadd.f32 %v476, %v637
        %v662 = vadd.f32 %v477, %v642
        %v663 = vadd.f32 %v478, %v645
        %664 = vst [vmem:[#allocation2] sm:$0xff] %v648
        %665 = vst [vmem:[#allocation2 + $0x8] sm:$0xff] %v649
        %666 = vst [vmem:[#allocation2 + $0x10] sm:$0xff] %v650
        %667 = vst [vmem:[#allocation2 + $0x18] sm:$0xff] %v651
        %668 = vst [vmem:[#allocation2 + $0x20] sm:$0xff] %v652
        %669 = vst [vmem:[#allocation2 + $0x28] sm:$0xff] %v653
        %670 = vst [vmem:[#allocation2 + $0x30] sm:$0xff] %v654
        %671 = vst [vmem:[#allocation2 + $0x38] sm:$0xff] %v655
        %672 = vst [vmem:[#allocation2 + $0x40] sm:$0xff] %v656
        %673 = vst [vmem:[#allocation2 + $0x48] sm:$0xff] %v657
        %674 = vst [vmem:[#allocation2 + $0x50] sm:$0xff] %v658
        %675 = vst [vmem:[#allocation2 + $0x58] sm:$0xff] %v659
        %676 = vst [vmem:[#allocation2 + $0x60] sm:$0xff] %v660
        %677 = vst [vmem:[#allocation2 + $0x68] sm:$0xff] %v661
        %678 = vst [vmem:[#allocation2 + $0x70] sm:$0xff] %v662
        %679 = vst [vmem:[#allocation2 + $0x78] sm:$0xff] %v663
        %p680 = scmp.eq.s32.totalorder %s26, 1
        // Predicated region
        $region45: #{tpu_custom_call.1} parent=35 // pred_check
          %p681 = pneg %p680
        $region46: #{tpu_custom_call.1} parent=35 // pred_check_branch
          %683 = sbr.rel (%p681) target = $region48
        $region47: #{tpu_custom_call.1} parent=35 // pred_region
          %v684 = vld [vmem:[#allocation2] sm:$0xff]
          %v685 = vld [vmem:[#allocation2 + $0x8] sm:$0xff]
          %v686 = vld [vmem:[#allocation2 + $0x10] sm:$0xff]
          %v687 = vld [vmem:[#allocation2 + $0x18] sm:$0xff]
          %v688 = vld [vmem:[#allocation2 + $0x20] sm:$0xff]
          %v689 = vld [vmem:[#allocation2 + $0x28] sm:$0xff]
          %v690 = vld [vmem:[#allocation2 + $0x30] sm:$0xff]
          %v691 = vld [vmem:[#allocation2 + $0x38] sm:$0xff]
          %v692 = vld [vmem:[#allocation2 + $0x40] sm:$0xff]
          %v693 = vld [vmem:[#allocation2 + $0x48] sm:$0xff]
          %v694 = vld [vmem:[#allocation2 + $0x50] sm:$0xff]
          %v695 = vld [vmem:[#allocation2 + $0x58] sm:$0xff]
          %v696 = vld [vmem:[#allocation2 + $0x60] sm:$0xff]
          %v697 = vld [vmem:[#allocation2 + $0x68] sm:$0xff]
          %v698 = vld [vmem:[#allocation2 + $0x70] sm:$0xff]
          %v699 = vld [vmem:[#allocation2 + $0x78] sm:$0xff]
          %v700 = vld [vmem:[%s3] sm:$0x1]
          %v702 = vlaneseq
          %v703 = vshrl.u32 %v702, 7
          %v704 = vsub.s32 0, %v703
          %v705 = vrot.slane %v700, %v704
          %v707 = vadd.f32 %v684, %v705
          %v708 = vadd.f32 %v685, %v705
          %v709 = vadd.f32 %v686, %v705
          %v710 = vadd.f32 %v687, %v705
          %v711 = vadd.f32 %v688, %v705
          %v712 = vadd.f32 %v689, %v705
          %v713 = vadd.f32 %v690, %v705
          %v714 = vadd.f32 %v691, %v705
          %v715 = vadd.f32 %v692, %v705
          %v716 = vadd.f32 %v693, %v705
          %v717 = vadd.f32 %v694, %v705
          %v718 = vadd.f32 %v695, %v705
          %v719 = vadd.f32 %v696, %v705
          %v720 = vadd.f32 %v697, %v705
          %v721 = vadd.f32 %v698, %v705
          %v722 = vadd.f32 %v699, %v705
          %v723 = vmax.f32 %v707, 0.0
          %v724 = vmax.f32 %v708, 0.0
          %v725 = vmax.f32 %v709, 0.0
          %v726 = vmax.f32 %v710, 0.0
          %v727 = vmax.f32 %v711, 0.0
          %v728 = vmax.f32 %v712, 0.0
          %v729 = vmax.f32 %v713, 0.0
          %v730 = vmax.f32 %v714, 0.0
          %v731 = vmax.f32 %v715, 0.0
          %v732 = vmax.f32 %v716, 0.0
          %v733 = vmax.f32 %v717, 0.0
          %v734 = vmax.f32 %v718, 0.0
          %v735 = vmax.f32 %v719, 0.0
          %v736 = vmax.f32 %v720, 0.0
          %v737 = vmax.f32 %v721, 0.0
          %v738 = vmax.f32 %v722, 0.0
          %v739 = vpack.c.bf16 %v724, %v723
          %v740 = vpack.c.bf16 %v726, %v725
          %v741 = vpack.c.bf16 %v728, %v727
          %v742 = vpack.c.bf16 %v730, %v729
          %v743 = vpack.c.bf16 %v732, %v731
          %v744 = vpack.c.bf16 %v734, %v733
          %v745 = vpack.c.bf16 %v736, %v735
          %v746 = vpack.c.bf16 %v738, %v737
          %v755 = vunpack.c.l.b16 %v739
          %v756 = vunpack.c.h.b16 %v739
          %v757 = vunpack.c.l.b16 %v740
          %v758 = vunpack.c.h.b16 %v740
          %v759 = vunpack.c.l.b16 %v741
          %v760 = vunpack.c.h.b16 %v741
          %v761 = vunpack.c.l.b16 %v742
          %v762 = vunpack.c.h.b16 %v742
          %v763 = vunpack.c.l.b16 %v743
          %v764 = vunpack.c.h.b16 %v743
          %v765 = vunpack.c.l.b16 %v744
          %v766 = vunpack.c.h.b16 %v744
          %v767 = vunpack.c.l.b16 %v745
          %v768 = vunpack.c.h.b16 %v745
          %v769 = vunpack.c.l.b16 %v746
          %v770 = vunpack.c.h.b16 %v746
          %v771 = vpack.c.b16 %v755, %v755
          %v772 = vpack.c.b16 %v756, %v756
          %v773 = vpack.c.b16 %v757, %v757
          %v774 = vpack.c.b16 %v758, %v758
          %v775 = vpack.c.b16 %v759, %v759
          %v776 = vpack.c.b16 %v760, %v760
          %v777 = vpack.c.b16 %v761, %v761
          %v778 = vpack.c.b16 %v762, %v762
          %v779 = vpack.c.b16 %v763, %v763
          %v780 = vpack.c.b16 %v764, %v764
          %v781 = vpack.c.b16 %v765, %v765
          %v782 = vpack.c.b16 %v766, %v766
          %v783 = vpack.c.b16 %v767, %v767
          %v784 = vpack.c.b16 %v768, %v768
          %v785 = vpack.c.b16 %v769, %v769
          %v786 = vpack.c.b16 %v770, %v770
          %803 = vst [vmem:[%s247] sm:$0xf] %v771
          %804 = vst [vmem:[%s247 + $0x4] sm:$0xf] %v772
          %805 = vst [vmem:[%s247 + $0x8] sm:$0xf] %v773
          %806 = vst [vmem:[%s247 + $0xc] sm:$0xf] %v774
          %807 = vst [vmem:[%s247 + $0x10] sm:$0xf] %v775
          %808 = vst [vmem:[%s247 + $0x14] sm:$0xf] %v776
          %809 = vst [vmem:[%s247 + $0x18] sm:$0xf] %v777
          %810 = vst [vmem:[%s247 + $0x1c] sm:$0xf] %v778
          %811 = vst [vmem:[%s247 + $0x20] sm:$0xf] %v779
          %812 = vst [vmem:[%s247 + $0x24] sm:$0xf] %v780
          %813 = vst [vmem:[%s247 + $0x28] sm:$0xf] %v781
          %814 = vst [vmem:[%s247 + $0x2c] sm:$0xf] %v782
          %815 = vst [vmem:[%s247 + $0x30] sm:$0xf] %v783
          %816 = vst [vmem:[%s247 + $0x34] sm:$0xf] %v784
          %817 = vst [vmem:[%s247 + $0x38] sm:$0xf] %v785
          %818 = vst [vmem:[%s247 + $0x3c] sm:$0xf] %v786
        $region48: #{tpu_custom_call.1} parent=35 // pred_fallthru
          _
        %s819 = sand.u32 %s137, 1
        %s820 = scalar_lea.sflag [#allocation5], %s819
        %s821 = sand.u32 %s137, 1
        %s822 = smul.addr %s821, 64
        %s823 = scalar_lea.vmem [#allocation6], %s822
        // Predicated region
        $region49: #{tpu_custom_call.1} parent=35 // pred_check
          %p824 = pneg %p147
        $region50: #{tpu_custom_call.1} parent=35 // pred_check_branch
          %826 = sbr.rel (%p824) target = $region52
        $region51: #{tpu_custom_call.1} parent=35 // pred_region
          %s827 = smul.u32 16, %s25
          %s829 = ssub.s32 1024, 1024
          %830 = vsyncadd %s820, %s829
          %s831 = smul.addr %s827, 64
          %s832 = scalar_lea.hbm %s4, %s831
          %s833 = sshll.u32 %s823, 4
          %s834 = int_to_ptr.vmem [resolvable:$true] %s833
          %839 = dma.vmem_to_hbm [thread:$0]  %s834, 1024, %s832, %s820, 64, 64, 4
        $region52: #{tpu_custom_call.1} parent=35 // pred_fallthru
          _
      $region36: #{tpu_custom_call.1} parent=5 // pred_fallthru
        _
      %p840 = scmp.le.s32.totalorder 2, %s16
      // Predicated region
      $region53: #{tpu_custom_call.1} parent=5 // pred_check
        %p841 = pneg %p840
      $region54: #{tpu_custom_call.1} parent=5 // pred_check_branch
        %843 = sbr.rel (%p841) target = $region56
      $region55: #{tpu_custom_call.1} parent=5 // pred_region
        %s844 = ssub.s32 %s16, 2
        // Predicated region
        $region57: #{tpu_custom_call.1} parent=55 // pred_check
          %p845 = pneg %p153
        $region58: #{tpu_custom_call.1} parent=55 // pred_check_branch
          %847 = sbr.rel (%p845) target = $region60
        $region59: #{tpu_custom_call.1} parent=55 // pred_region
          %s848 = sand.u32 %s138, 1
          %s849 = scalar_lea.sflag [#allocation5], %s848
          %s850 = sand.u32 %s138, 1
          %s851 = smul.addr %s850, 64
          %s852 = scalar_lea.vmem [#allocation6], %s851
          %853 = dma.done %s849, 1024
        $region60: #{tpu_custom_call.1} parent=55 // pred_fallthru
          _
      $region56: #{tpu_custom_call.1} parent=5 // pred_fallthru
        _
    $region6: #{tpu_custom_call.1} parent=1 // loop_footer
      %s20 = sadd.s32 1, %s16
    $region7: #{tpu_custom_call.1} parent=1 // loop_footer_branch
      %15 = sbr.rel target = $region3
    $region8: #{tpu_custom_call.1} parent=1 // loop_exit
      _
    %854 = vsyncpa [#allocation4], 1
    %s855 = scalar_lea.sflag [#allocation4], 1
    %856 = vsyncpa %s855, 1
    %857 = vsyncpa [#allocation5], 1
    %s858 = scalar_lea.sflag [#allocation5], 1
    %859 = vsyncpa %s858, 1

</llo_original>
